<compile_context>
chip_gen: v5e
topology: v5e:2x2
jax: 0.10.0
libtpu: 0.0.40
codegen_flags: <defaults>
</compile_context>

<pallas_src>
import math

import jax
import jax.numpy as jnp
from jax.experimental import pallas as pl
from jax.experimental.pallas import tpu as pltpu


# ----------------------------- Pallas kernel --------------------------------
def phase_mask_kernel(xr_ref, xi_ref, mr_ref, mi_ref, or_ref, oi_ref):
    # Pure VPU elementwise complex multiply. The complex mask (m_r, m_i) is
    # precomputed in the wrapper; its block index is constant across the batch
    # (innermost) grid axis, so Pallas DMAs each mask tile only once.
    x_r = xr_ref[...]
    x_i = xi_ref[...]
    m_r = mr_ref[...]
    m_i = mi_ref[...]
    # (x_r + i x_i) * (m_r + i m_i)
    or_ref[...] = x_r * m_r - x_i * m_i
    oi_ref[...] = x_r * m_i + x_i * m_r


_SUBLANES = 8
_LANES = 128
_NUM_STREAMS = 6  # xr, xi, mr, mi, or, oi -- each double-buffered by the pipeline


def _vmem_capacity_bytes():
    """Physical per-core VMEM, with a conservative (v7x, 64 MiB) fallback."""
    try:
        info = pltpu.get_tpu_info()
        for attr in ("vmem_capacity_bytes", "vmem_size_bytes", "vmem_bytes"):
            v = getattr(info, attr, None)
            if v:
                return int(v)
    except Exception:
        pass
    return 64 * 1024 * 1024


def _block_budget():
    """(max bytes per per-array block, vmem_limit_bytes) tuned per generation."""
    cap = _vmem_capacity_bytes()
    if cap >= 96 * 1024 * 1024:
        # v5e / v6e: 128 MiB physical VMEM. 6 streams x 2 bufs x 4 MiB = 48 MiB.
        return 4 * 1024 * 1024, 64 * 1024 * 1024
    # v7x: 64 MiB physical VMEM. 6 streams x 2 bufs x 2 MiB = 24 MiB.
    return 2 * 1024 * 1024, 32 * 1024 * 1024


def _pick_tile_cols(n_cols, max_cols, want_multiple_tiles):
    """Largest multiple of 128 dividing n_cols and <= max_cols.

    When want_multiple_tiles (only when B < 2, i.e. the batch axis alone cannot
    feed both v7x TensorCores), prefer a tile that yields an even (>=2) number
    of spatial tiles so the two cores split evenly."""
    limit = min(n_cols, max_cols)
    divisors = [t for t in range(_LANES, limit + 1, _LANES) if n_cols % t == 0]
    if not divisors:
        return None
    if want_multiple_tiles:
        even = [t for t in divisors if (n_cols // t) >= 2 and (n_cols // t) % 2 == 0]
        if even:
            return max(even)
        multi = [t for t in divisors if (n_cols // t) >= 2]
        if multi:
            return max(multi)
    return max(divisors)


def _pick_tile_rows(h, w, max_block_bytes):
    """Largest multiple of 8 dividing h with th*w*4 <= budget; else full h."""
    if h % _SUBLANES == 0:
        cands = [th for th in range(_SUBLANES, h + 1, _SUBLANES)
                 if h % th == 0 and th * w * 4 <= max_block_bytes]
        if cands:
            return max(cands)
    return h


def phase_mask_forward(x_real, x_imag, mask_real, mask_imag):
    """Planar complex multiply (the hot path of PhaseMask.forward).

    x_real/x_imag: (B, H, W) f32; mask_real/mask_imag: (1, H, W) f32 (zero padded).

    Returns (out_real, out_imag) as two (B, H, W) f32 arrays. Planar is the
    preferred downstream representation; use planar_to_complex() only if a
    complex64 array is actually required (that conversion costs an extra HBM
    read+write pass)."""
    B, H, W = x_real.shape
    assert mask_real.shape == (1, H, W) and mask_imag.shape == (1, H, W)
    n = H * W

    max_block_bytes, vmem_limit = _block_budget()

    tc = None
    if n % (_SUBLANES * _LANES) == 0:
        cols = n // _SUBLANES
        max_cols = max(_LANES, max_block_bytes // (_SUBLANES * 4))
        tc = _pick_tile_cols(cols, max_cols, want_multiple_tiles=(B < 2))

    if tc is not None:
        # Lane-dense layout: (B, H, W) -> (B, 8, n//8). Last block dim is a
        # large multiple of 128 (unmasked stores, full vregs). Grid is
        # (spatial, batch) with batch innermost: the mask block index stays
        # constant while b varies, so each mask tile is DMA'd exactly once.
        # For small problems (e.g. the demo) this collapses to grid (1, B),
        # which is already near the single-step minimum-overhead case.
        xr = x_real.reshape(B, _SUBLANES, cols)
        xi = x_imag.reshape(B, _SUBLANES, cols)
        mr = mask_real.reshape(1, _SUBLANES, cols)
        mi = mask_imag.reshape(1, _SUBLANES, cols)
        grid = (cols // tc, B)
        x_spec = pl.BlockSpec((1, _SUBLANES, tc), lambda c, b: (b, 0, c))
        m_spec = pl.BlockSpec((1, _SUBLANES, tc), lambda c, b: (0, 0, c))
        out_struct_shape = (B, _SUBLANES, cols)
    else:
        # Fallback (H*W not a multiple of 1024): tile along H in (1, th, W)
        # blocks (th a multiple of 8 when possible) so blocks always stay
        # within the per-generation VMEM budget. Grid is still (spatial, batch)
        # so the mask row-tiles are fetched once, not B times.
        # Note: if W < 128 this path produces masked partial stores; pad W up
        # to 128 in the wrapper if this path ever becomes hot.
        th = _pick_tile_rows(H, W, max_block_bytes)
        xr, xi, mr, mi = x_real, x_imag, mask_real, mask_imag
        grid = (H // th, B)
        x_spec = pl.BlockSpec((1, th, W), lambda h, b: (b, h, 0))
        m_spec = pl.BlockSpec((1, th, W), lambda h, b: (0, h, 0))
        out_struct_shape = (B, H, W)

    out_r, out_i = pl.pallas_call(
        phase_mask_kernel,
        out_shape=(
            jax.ShapeDtypeStruct(out_struct_shape, jnp.float32),
            jax.ShapeDtypeStruct(out_struct_shape, jnp.float32),
        ),
        grid_spec=pltpu.PrefetchScalarGridSpec(
            num_scalar_prefetch=0,
            grid=grid,
            in_specs=[x_spec, x_spec, m_spec, m_spec],
            out_specs=[x_spec, x_spec],
        ),
        compiler_params=pltpu.CompilerParams(
            dimension_semantics=("parallel", "parallel"),
            vmem_limit_bytes=vmem_limit,
        ),
    )(xr, xi, mr, mi)

    return out_r.reshape(B, H, W), out_i.reshape(B, H, W)


def planar_to_complex(out_real, out_imag):
    """Optional conversion to complex64 (costs one extra XLA interleave pass)."""
    return jax.lax.complex(out_real, out_imag)


# --------------------------- parameter-setup glue ----------------------------
def dorefa_w(w, nbit_w):
    # nbit_w = 8 path of the PyTorch dorefa_w (the 1-bit branch is not used here).
    w = jnp.tanh(w)
    max_w = jnp.max(jnp.abs(w))
    w = w / 2.0 / max_w + 0.5
    scale = 2.0 ** nbit_w - 1.0
    w = jnp.round(w * scale) / scale  # Quantizer.forward
    w = 1.999 * w - 1.0
    return w


def init_phase_param(key, phase_dim):
    """Deterministic equivalent of nn.init.kaiming_uniform_(w_p, a=sqrt(5)) on (1, P, P)."""
    fan_in = phase_dim * phase_dim                  # shape[1] * prod(shape[2:])
    gain = math.sqrt(2.0 / (1.0 + 5.0))             # a = sqrt(5)
    bound = gain * math.sqrt(3.0 / fan_in)
    return jax.random.uniform(
        key, (1, phase_dim, phase_dim), dtype=jnp.float32, minval=-bound, maxval=bound
    )


def build_complex_mask(w_p, whole_dim, phase_dim):
    """Precompute the padded complex mask (real, imag) once in plain JAX.

    Zero-padding cos/sin directly reproduces F.pad of the complex mask, so no
    separate 'valid' array (and no per-element cos/sin in the kernel)."""
    pad_size = (whole_dim - phase_dim) // 2
    mask_phase = dorefa_w(w_p, 8) * math.pi                       # (1, P, P)
    pads = ((0, 0), (pad_size, pad_size), (pad_size, pad_size))
    mask_real = jnp.pad(jnp.cos(mask_phase), pads)                # (1, W, W)
    mask_imag = jnp.pad(jnp.sin(mask_phase), pads)                # (1, W, W)
    return mask_real, mask_imag


# --------------------------------- main --------------------------------------
if __name__ == "__main__":
    whole_dim = 64
    phase_dim = 32
    batch = 2

    key = jax.random.PRNGKey(0)
    k_w, k_xr, k_xi = jax.random.split(key, 3)

    # Parameter (deterministic kaiming-uniform init, as in __init__/init_weights).
    w_p = init_phase_param(k_w, phase_dim)

    # Complex input field (B, whole_dim, whole_dim), held planar.
    x_real = jax.random.normal(k_xr, (batch, whole_dim, whole_dim), dtype=jnp.float32)
    x_imag = jax.random.normal(k_xi, (batch, whole_dim, whole_dim), dtype=jnp.float32)

    mask_real, mask_imag = build_complex_mask(w_p, whole_dim, phase_dim)

    out_r, out_i = phase_mask_forward(x_real, x_imag, mask_real, mask_imag)
    (out_r, out_i) = jax.block_until_ready((out_r, out_i))

    # Pure-JAX reference check of the forward pass (recomputed from w_p).
    pad_size = (whole_dim - phase_dim) // 2
    mask_phase = dorefa_w(w_p, 8) * math.pi
    mask_ref = jnp.pad(
        jax.lax.complex(jnp.cos(mask_phase), jnp.sin(mask_phase)),
        ((0, 0), (pad_size, pad_size), (pad_size, pad_size)),
    )
    ref = jax.lax.complex(x_real, x_imag) * mask_ref

    assert out_r.shape == (batch, whole_dim, whole_dim)
    assert out_i.shape == (batch, whole_dim, whole_dim)
    assert jnp.allclose(out_r, jnp.real(ref), atol=1e-5, rtol=1e-5)
    assert jnp.allclose(out_i, jnp.imag(ref), atol=1e-5, rtol=1e-5)

    # Semantic parity with the PyTorch module's complex64 output (conversion is
    # optional and kept out of the hot path).
    out_c = planar_to_complex(out_r, out_i)
    assert out_c.dtype == jnp.complex64
    assert jnp.allclose(out_c, ref, atol=1e-5, rtol=1e-5)

    print("KERNEL_OK")
</pallas_src>

<mosaic_0001>
module attributes {stable_mosaic.version = 11 : i64} {
  func.func @phase_mask_kernel(%arg0: i32, %arg1: i32, %arg2: memref<1x8x512xf32, #tpu.memory_space<vmem>>, %arg3: memref<1x8x512xf32, #tpu.memory_space<vmem>>, %arg4: memref<1x8x512xf32, #tpu.memory_space<vmem>>, %arg5: memref<1x8x512xf32, #tpu.memory_space<vmem>>, %arg6: memref<1x8x512xf32, #tpu.memory_space<vmem>>, %arg7: memref<1x8x512xf32, #tpu.memory_space<vmem>>) attributes {dimension_semantics = [#tpu.dimension_semantics<parallel>, #tpu.dimension_semantics<parallel>], iteration_bounds = array<i64: 1, 2>, scalar_prefetch = 0 : i64, scratch_operands = 0 : i64, tpu.core_type = #tpu.core_type<tc>, window_params = [{transform_indices = @transform_0, window_bounds = array<i64: 1, 8, 512>}, {transform_indices = @transform_1, window_bounds = array<i64: 1, 8, 512>}, {transform_indices = @transform_2, window_bounds = array<i64: 1, 8, 512>}, {transform_indices = @transform_3, window_bounds = array<i64: 1, 8, 512>}, {transform_indices = @transform_4, window_bounds = array<i64: 1, 8, 512>}, {transform_indices = @transform_5, window_bounds = array<i64: 1, 8, 512>}]} {
    %c0 = arith.constant 0 : index
    %c0_0 = arith.constant 0 : index
    %c0_1 = arith.constant 0 : index
    %0 = vector.load %arg2[%c0, %c0_0, %c0_1] : memref<1x8x512xf32, #tpu.memory_space<vmem>>, vector<1x8x512xf32>
    %c0_2 = arith.constant 0 : index
    %c0_3 = arith.constant 0 : index
    %c0_4 = arith.constant 0 : index
    %1 = vector.load %arg3[%c0_2, %c0_3, %c0_4] : memref<1x8x512xf32, #tpu.memory_space<vmem>>, vector<1x8x512xf32>
    %c0_5 = arith.constant 0 : index
    %c0_6 = arith.constant 0 : index
    %c0_7 = arith.constant 0 : index
    %2 = vector.load %arg4[%c0_5, %c0_6, %c0_7] : memref<1x8x512xf32, #tpu.memory_space<vmem>>, vector<1x8x512xf32>
    %c0_8 = arith.constant 0 : index
    %c0_9 = arith.constant 0 : index
    %c0_10 = arith.constant 0 : index
    %3 = vector.load %arg5[%c0_8, %c0_9, %c0_10] : memref<1x8x512xf32, #tpu.memory_space<vmem>>, vector<1x8x512xf32>
    %4 = arith.mulf %0, %2 : vector<1x8x512xf32>
    %5 = arith.mulf %1, %3 : vector<1x8x512xf32>
    %6 = arith.subf %4, %5 : vector<1x8x512xf32>
    %c0_11 = arith.constant 0 : index
    %c0_12 = arith.constant 0 : index
    %c0_13 = arith.constant 0 : index
    %7 = vector.load %arg6[%c0_11, %c0_12, %c0_13] : memref<1x8x512xf32, #tpu.memory_space<vmem>>, vector<1x8x512xf32>
    tpu.vector_store %arg6[%c0_11, %c0_12, %c0_13], %6 {strides = array<i32>} : memref<1x8x512xf32, #tpu.memory_space<vmem>>, vector<1x8x512xf32>,
    %8 = arith.mulf %0, %3 : vector<1x8x512xf32>
    %9 = arith.mulf %1, %2 : vector<1x8x512xf32>
    %10 = arith.addf %8, %9 : vector<1x8x512xf32>
    %c0_14 = arith.constant 0 : index
    %c0_15 = arith.constant 0 : index
    %c0_16 = arith.constant 0 : index
    %11 = vector.load %arg7[%c0_14, %c0_15, %c0_16] : memref<1x8x512xf32, #tpu.memory_space<vmem>>, vector<1x8x512xf32>
    tpu.vector_store %arg7[%c0_14, %c0_15, %c0_16], %10 {strides = array<i32>} : memref<1x8x512xf32, #tpu.memory_space<vmem>>, vector<1x8x512xf32>,
    return
  }
  func.func @transform_0(%arg0: i32, %arg1: i32) -> (i32, i32, i32) {
    %c0_i32 = arith.constant 0 : i32
    %c0_i32_0 = arith.constant 0 : i32
    return %arg1, %c0_i32, %arg0 : i32, i32, i32
  }
  func.func @transform_1(%arg0: i32, %arg1: i32) -> (i32, i32, i32) {
    %c0_i32 = arith.constant 0 : i32
    %c0_i32_0 = arith.constant 0 : i32
    return %arg1, %c0_i32, %arg0 : i32, i32, i32
  }
  func.func @transform_2(%arg0: i32, %arg1: i32) -> (i32, i32, i32) {
    %c0_i32 = arith.constant 0 : i32
    %c0_i32_0 = arith.constant 0 : i32
    %c0_i32_1 = arith.constant 0 : i32
    return %c0_i32, %c0_i32_0, %arg0 : i32, i32, i32
  }
  func.func @transform_3(%arg0: i32, %arg1: i32) -> (i32, i32, i32) {
    %c0_i32 = arith.constant 0 : i32
    %c0_i32_0 = arith.constant 0 : i32
    %c0_i32_1 = arith.constant 0 : i32
    return %c0_i32, %c0_i32_0, %arg0 : i32, i32, i32
  }
  func.func @transform_4(%arg0: i32, %arg1: i32) -> (i32, i32, i32) {
    %c0_i32 = arith.constant 0 : i32
    %c0_i32_0 = arith.constant 0 : i32
    return %arg1, %c0_i32, %arg0 : i32, i32, i32
  }
  func.func @transform_5(%arg0: i32, %arg1: i32) -> (i32, i32, i32) {
    %c0_i32 = arith.constant 0 : i32
    %c0_i32_0 = arith.constant 0 : i32
    return %arg1, %c0_i32, %arg0 : i32, i32, i32
  }
}

</mosaic_0001>

<llo_original>
// kernel: tpu_custom_call.1
$region0: #{tpu_custom_call.1}
  #allocation0 [shape = 'u32[]', space=smem, size = 0x4, offset = 0x4, fixed_abs, tag = 'smem constant byte address 0x4 - core index']
  #allocation1 [shape = 'u32[72,128]{1,0:T(1,128)}', space=vmem, size = 0x9000, scoped, tag = 'internal scratch']
  %s0 = inlined_call_operand.hbm [shape: f32[2,8,512], index: 0, kind: input, shape index: {}]
  %s1 = inlined_call_operand.hbm [shape: f32[2,8,512], index: 1, kind: input, shape index: {}]
  %s2 = inlined_call_operand.hbm [shape: f32[1,8,512], index: 2, kind: input, shape index: {}]
  %s3 = inlined_call_operand.hbm [shape: f32[1,8,512], index: 3, kind: input, shape index: {}]
  %s4 = inlined_call_operand.hbm [shape: f32[2,8,512], index: 4, kind: output, shape index: {0}]
  %s5 = inlined_call_operand.hbm [shape: f32[2,8,512], index: 5, kind: output, shape index: {1}]
  %6 = xla_tuple %s4, %s5
  %s7 = sld [smem:[#allocation0]]
  $region73: #{tpu_custom_call.1} parent=0
    _
  %s9 = ssub.s32 1, %s7
  %s10 = scalar_select 0, %s9, %s7
  $region1: #{tpu_custom_call.1} parent=0
    #allocation2 [shape = 'u8[32768]{0}', space=vmem, size = 0x8000, scoped, tag = 'input window, operand 0']
    #allocation3 [shape = 's32[2]{0}', space=sflag, size = 0x8, scoped, tag = 'scoped memory for tpu_custom_call.1']
    #allocation4 [shape = 's32[2]{0}', space=sflag, size = 0x8, scoped, tag = 'scoped memory for tpu_custom_call.1']
    #allocation5 [shape = 'u8[32768]{0}', space=vmem, size = 0x8000, scoped, tag = 'input window, operand 1']
    #allocation6 [shape = 's32[2]{0}', space=sflag, size = 0x8, scoped, tag = 'scoped memory for tpu_custom_call.1']
    #allocation7 [shape = 'u8[16384]{0}', space=vmem, size = 0x4000, scoped, tag = 'input window, operand 2, single buffered']
    #allocation8 [shape = 'u8[16384]{0}', space=vmem, size = 0x4000, scoped, tag = 'input window, operand 3, single buffered']
    #allocation9 [shape = 's32[1]{0}', space=sflag, size = 0x4, scoped, tag = 'scoped memory for tpu_custom_call.1']
    #allocation10 [shape = 'u8[32768]{0}', space=vmem, size = 0x8000, scoped, tag = 'output window, operand 0']
    #allocation11 [shape = 'u8[32768]{0}', space=vmem, size = 0x8000, scoped, tag = 'output window, operand 1']
    #allocation12 [shape = 's32[2]{0}', space=sflag, size = 0x8, scoped, tag = 'scoped memory for tpu_custom_call.1']
    %11 = vsyncpa [#allocation3], 0
    %s12 = scalar_lea.sflag [#allocation3], 1
    %13 = vsyncpa %s12, 0
    %14 = vsyncpa [#allocation6], 0
    %s15 = scalar_lea.sflag [#allocation6], 1
    %16 = vsyncpa %s15, 0
    %17 = vsyncpa [#allocation9], 0
    %18 = vsyncpa [#allocation4], 0
    %s19 = scalar_lea.sflag [#allocation4], 1
    %20 = vsyncpa %s19, 0
    %21 = vsyncpa [#allocation12], 0
    %s22 = scalar_lea.sflag [#allocation12], 1
    %23 = vsyncpa %s22, 0
    loop: start=0, step=1, limit=4
    $region2: #{tpu_custom_call.1} parent=1 // loop_pre_header
      _
    $region3: #{tpu_custom_call.1} parent=1 // loop_header
      %s25 = sphi 0, %s29
      %p26 = scmp.ge.s32.totalorder %s25, 4
      %s32 = sphi 0, %s44
      %s33 = sphi 0, %s40
      %s34 = sphi 0, %s32
      %s35 = sphi 0, %s33
      %s36 = sphi 0, %s34
      %s37 = sphi 0, %s35
      %s49 = sphi 0, %s51
      %s52 = sphi 0, %s49
      %s53 = sphi 0, %s52
      %s69 = sphi 0, %s53
      %s77 = sphi 0, %s79
      %s80 = sphi 0, %s77
      %s81 = sphi 0, %s80
      %s97 = sphi 0, %s81
      %s103 = sphi 0, %s105
      %s106 = sphi 0, %s103
      %s107 = sphi 0, %s106
      %s123 = sphi 0, %s107
      %s129 = sphi 0, %s131
      %s132 = sphi 0, %s129
      %s133 = sphi 0, %s132
      %s149 = sphi 0, %s133
      %s157 = sphi 0, %s159
      %s160 = sphi 0, %s157
      %s161 = sphi 0, %s160
      %s177 = sphi 0, %s161
      %s185 = sphi 0, %s187
      %s188 = sphi 0, %s185
      %s189 = sphi 0, %s188
      %s205 = sphi 0, %s189
    $region4: #{tpu_custom_call.1} parent=1 // loop_header_branch
      %28 = sbr.rel (%p26) target = $region8
    $region5: #{tpu_custom_call.1} parent=1 // loop_body
      %s30 = ssub.s32 %s25, 1
      %s31 = ssub.s32 %s25, 2
      %s38 = sadd.s32 1, %s33
      %p39 = scmp.ge.s32.totalorder %s38, 2
      %s40 = scalar_select %p39, 0, %s38
      %s41 = sadd.s32 1, %s32
      %s42 = scalar_select %p39, %s41, %s32
      %p43 = scmp.ge.s32.totalorder %s42, 1
      %s44 = scalar_select %p43, 0, %s42
      %s45 = ssub.s32 %s33, %s40
      %s46 = ssub.s32 %s32, %s44
      %s47 = sor.u32 %s45, %s46
      %p48 = scmp.eq.s32.totalorder %s47, 0
      %s50 = sadd.s32 %s49, 1
      %s51 = scalar_select %p48, %s49, %s50
      %p54 = pneg %p48
      %p55 = scmp.eq.s32.totalorder %s25, 1
      %p56 = por %p54, %p55
      %p57 = scmp.ne.s32.totalorder %s49, %s52
      %p58 = scmp.eq.s32.totalorder %s25, 0
      %p59 = por %p57, %p58
      %p60 = scmp.ne.s32.totalorder %s49, %s52
      %p61 = scmp.eq.s32.totalorder %s30, 1
      %p62 = por %p60, %p61
      %p63 = scmp.ne.s32.totalorder %s52, %s53
      %p64 = scmp.eq.s32.totalorder %s30, 0
      %p65 = por %p63, %p64
      %p66 = scmp.ne.s32.totalorder %s52, %s53
      %p67 = scmp.eq.s32.totalorder %s31, 1
      %p68 = por %p66, %p67
      %p70 = scmp.ne.s32.totalorder %s53, %s69
      %p71 = scmp.eq.s32.totalorder %s31, 0
      %p72 = por %p70, %p71
      %s73 = ssub.s32 %s33, %s40
      %s74 = ssub.s32 %s32, %s44
      %s75 = sor.u32 %s73, %s74
      %p76 = scmp.eq.s32.totalorder %s75, 0
      %s78 = sadd.s32 %s77, 1
      %s79 = scalar_select %p76, %s77, %s78
      %p82 = pneg %p76
      %p83 = scmp.eq.s32.totalorder %s25, 1
      %p84 = por %p82, %p83
      %p85 = scmp.ne.s32.totalorder %s77, %s80
      %p86 = scmp.eq.s32.totalorder %s25, 0
      %p87 = por %p85, %p86
      %p88 = scmp.ne.s32.totalorder %s77, %s80
      %p89 = scmp.eq.s32.totalorder %s30, 1
      %p90 = por %p88, %p89
      %p91 = scmp.ne.s32.totalorder %s80, %s81
      %p92 = scmp.eq.s32.totalorder %s30, 0
      %p93 = por %p91, %p92
      %p94 = scmp.ne.s32.totalorder %s80, %s81
      %p95 = scmp.eq.s32.totalorder %s31, 1
      %p96 = por %p94, %p95
      %p98 = scmp.ne.s32.totalorder %s81, %s97
      %p99 = scmp.eq.s32.totalorder %s31, 0
      %p100 = por %p98, %p99
      %s101 = ssub.s32 %s32, %s44
      %p102 = scmp.eq.s32.totalorder %s101, 0
      %s104 = sadd.s32 %s103, 1
      %s105 = scalar_select %p102, %s103, %s104
      %p108 = pneg %p102
      %p109 = scmp.eq.s32.totalorder %s25, 1
      %p110 = por %p108, %p109
      %p111 = scmp.ne.s32.totalorder %s103, %s106
      %p112 = scmp.eq.s32.totalorder %s25, 0
      %p113 = por %p111, %p112
      %p114 = scmp.ne.s32.totalorder %s103, %s106
      %p115 = scmp.eq.s32.totalorder %s30, 1
      %p116 = por %p114, %p115
      %p117 = scmp.ne.s32.totalorder %s106, %s107
      %p118 = scmp.eq.s32.totalorder %s30, 0
      %p119 = por %p117, %p118
      %p120 = scmp.ne.s32.totalorder %s106, %s107
      %p121 = scmp.eq.s32.totalorder %s31, 1
      %p122 = por %p120, %p121
      %p124 = scmp.ne.s32.totalorder %s107, %s123
      %p125 = scmp.eq.s32.totalorder %s31, 0
      %p126 = por %p124, %p125
      %s127 = ssub.s32 %s32, %s44
      %p128 = scmp.eq.s32.totalorder %s127, 0
      %s130 = sadd.s32 %s129, 1
      %s131 = scalar_select %p128, %s129, %s130
      %p134 = pneg %p128
      %p135 = scmp.eq.s32.totalorder %s25, 1
      %p136 = por %p134, %p135
      %p137 = scmp.ne.s32.totalorder %s129, %s132
      %p138 = scmp.eq.s32.totalorder %s25, 0
      %p139 = por %p137, %p138
      %p140 = scmp.ne.s32.totalorder %s129, %s132
      %p141 = scmp.eq.s32.totalorder %s30, 1
      %p142 = por %p140, %p141
      %p143 = scmp.ne.s32.totalorder %s132, %s133
      %p144 = scmp.eq.s32.totalorder %s30, 0
      %p145 = por %p143, %p144
      %p146 = scmp.ne.s32.totalorder %s132, %s133
      %p147 = scmp.eq.s32.totalorder %s31, 1
      %p148 = por %p146, %p147
      %p150 = scmp.ne.s32.totalorder %s133, %s149
      %p151 = scmp.eq.s32.totalorder %s31, 0
      %p152 = por %p150, %p151
      %s153 = ssub.s32 %s33, %s40
      %s154 = ssub.s32 %s32, %s44
      %s155 = sor.u32 %s153, %s154
      %p156 = scmp.eq.s32.totalorder %s155, 0
      %s158 = sadd.s32 %s157, 1
      %s159 = scalar_select %p156, %s157, %s158
      %p162 = pneg %p156
      %p163 = scmp.eq.s32.totalorder %s25, 1
      %p164 = por %p162, %p163
      %p165 = scmp.ne.s32.totalorder %s157, %s160
      %p166 = scmp.eq.s32.totalorder %s25, 0
      %p167 = por %p165, %p166
      %p168 = scmp.ne.s32.totalorder %s157, %s160
      %p169 = scmp.eq.s32.totalorder %s30, 1
      %p170 = por %p168, %p169
      %p171 = scmp.ne.s32.totalorder %s160, %s161
      %p172 = scmp.eq.s32.totalorder %s30, 0
      %p173 = por %p171, %p172
      %p174 = scmp.ne.s32.totalorder %s160, %s161
      %p175 = scmp.eq.s32.totalorder %s31, 1
      %p176 = por %p174, %p175
      %p178 = scmp.ne.s32.totalorder %s161, %s177
      %p179 = scmp.eq.s32.totalorder %s31, 0
      %p180 = por %p178, %p179
      %s181 = ssub.s32 %s33, %s40
      %s182 = ssub.s32 %s32, %s44
      %s183 = sor.u32 %s181, %s182
      %p184 = scmp.eq.s32.totalorder %s183, 0
      %s186 = sadd.s32 %s185, 1
      %s187 = scalar_select %p184, %s185, %s186
      %p190 = pneg %p184
      %p191 = scmp.eq.s32.totalorder %s25, 1
      %p192 = por %p190, %p191
      %p193 = scmp.ne.s32.totalorder %s185, %s188
      %p194 = scmp.eq.s32.totalorder %s25, 0
      %p195 = por %p193, %p194
      %p196 = scmp.ne.s32.totalorder %s185, %s188
      %p197 = scmp.eq.s32.totalorder %s30, 1
      %p198 = por %p196, %p197
      %p199 = scmp.ne.s32.totalorder %s188, %s189
      %p200 = scmp.eq.s32.totalorder %s30, 0
      %p201 = por %p199, %p200
      %p202 = scmp.ne.s32.totalorder %s188, %s189
      %p203 = scmp.eq.s32.totalorder %s31, 1
      %p204 = por %p202, %p203
      %p206 = scmp.ne.s32.totalorder %s189, %s205
      %p207 = scmp.eq.s32.totalorder %s31, 0
      %p208 = por %p206, %p207
      %p209 = scmp.le.s32.totalorder 1, %s25
      %p210 = scmp.lt.s32.totalorder %s25, 3
      %p211 = pnand %p209, %p210
      %p212 = pneg %p211
      // Predicated region
      $region9: #{tpu_custom_call.1} parent=5 // pred_check
        _
      $region10: #{tpu_custom_call.1} parent=5 // pred_check_branch
        %214 = sbr.rel (%p211) target = $region12
      $region11: #{tpu_custom_call.1} parent=5 // pred_region
        %s215 = ssub.s32 %s25, 1
        // Predicated region
        $region13: #{tpu_custom_call.1} parent=11 // pred_check
          %p216 = pneg %p119
        $region14: #{tpu_custom_call.1} parent=11 // pred_check_branch
          %218 = sbr.rel (%p216) target = $region16
        $region15: #{tpu_custom_call.1} parent=11 // pred_region
          %s219 = smul.u32 4, %s34
          %221 = vsyncadd [#allocation6], 0
          %s222 = smul.addr %s219, 8
          %s223 = scalar_lea.hbm %s2, %s222
          %s225 = sshll.u32 %s223, 4
          %s226 = int_to_ptr.hbm [resolvable:$true] %s225
          %s227 = sshll.u32 [#allocation7], 4
          %s228 = int_to_ptr.vmem [resolvable:$true] %s227
          %230 = dma.hbm_to_vmem [thread:$0]  %s226, 512, %s228, [#allocation6]
        $region16: #{tpu_custom_call.1} parent=11 // pred_fallthru
          _
        // Predicated region
        $region17: #{tpu_custom_call.1} parent=11 // pred_check
          %p231 = pneg %p145
        $region18: #{tpu_custom_call.1} parent=11 // pred_check_branch
          %233 = sbr.rel (%p231) target = $region20
        $region19: #{tpu_custom_call.1} parent=11 // pred_region
          %s234 = smul.u32 4, %s34
          %236 = vsyncadd [#allocation9], 0
          %s237 = smul.addr %s234, 8
          %s238 = scalar_lea.hbm %s3, %s237
          %s240 = sshll.u32 %s238, 4
          %s241 = int_to_ptr.hbm [resolvable:$true] %s240
          %s242 = sshll.u32 [#allocation8], 4
          %s243 = int_to_ptr.vmem [resolvable:$true] %s242
          %245 = dma.hbm_to_vmem [thread:$0]  %s241, 512, %s243, [#allocation9]
        $region20: #{tpu_custom_call.1} parent=11 // pred_fallthru
          _
      $region12: #{tpu_custom_call.1} parent=5 // pred_fallthru
        _
      %p246 = scmp.lt.s32.totalorder %s25, 2
      // Predicated region
      $region21: #{tpu_custom_call.1} parent=5 // pred_check
        %p247 = pneg %p246
      $region22: #{tpu_custom_call.1} parent=5 // pred_check_branch
        %249 = sbr.rel (%p247) target = $region24
      $region23: #{tpu_custom_call.1} parent=5 // pred_region
        // Predicated region
        $region25: #{tpu_custom_call.1} parent=23 // pred_check
          %p250 = pneg %p59
        $region26: #{tpu_custom_call.1} parent=23 // pred_check_branch
          %252 = sbr.rel (%p250) target = $region28
        $region27: #{tpu_custom_call.1} parent=23 // pred_region
          %s253 = sand.u32 %s49, 1
          %s254 = scalar_lea.sflag [#allocation3], %s253
          %s255 = sand.u32 %s49, 1
          %s256 = smul.addr %s255, 32
          %s257 = scalar_lea.vmem [#allocation2], %s256
          %s258 = smul.u32 4, %s32
          %260 = vsyncadd %s254, 0
          %s261 = smul.addr %s33, 4
          %s262 = sadd.s32 %s258, %s261
          %s263 = smul.addr %s262, 8
          %s264 = scalar_lea.hbm %s0, %s263
          %s266 = sshll.u32 %s264, 4
          %s267 = int_to_ptr.hbm [resolvable:$true] %s266
          %s268 = sshll.u32 %s257, 4
          %s269 = int_to_ptr.vmem [resolvable:$true] %s268
          %271 = dma.hbm_to_vmem [thread:$0]  %s267, 512, %s269, %s254
        $region28: #{tpu_custom_call.1} parent=23 // pred_fallthru
          _
        // Predicated region
        $region29: #{tpu_custom_call.1} parent=23 // pred_check
          %p272 = pneg %p87
        $region30: #{tpu_custom_call.1} parent=23 // pred_check_branch
          %274 = sbr.rel (%p272) target = $region32
        $region31: #{tpu_custom_call.1} parent=23 // pred_region
          %s275 = sand.u32 %s25, 1
          %s276 = scalar_lea.sflag [#allocation6], %s275
          %s277 = sand.u32 %s77, 1
          %s278 = smul.addr %s277, 32
          %s279 = scalar_lea.vmem [#allocation5], %s278
          %s280 = smul.u32 4, %s32
          %282 = vsyncadd %s276, 0
          %s283 = smul.addr %s33, 4
          %s284 = sadd.s32 %s280, %s283
          %s285 = smul.addr %s284, 8
          %s286 = scalar_lea.hbm %s1, %s285
          %s288 = sshll.u32 %s286, 4
          %s289 = int_to_ptr.hbm [resolvable:$true] %s288
          %s290 = sshll.u32 %s279, 4
          %s291 = int_to_ptr.vmem [resolvable:$true] %s290
          %293 = dma.hbm_to_vmem [thread:$0]  %s289, 512, %s291, %s276
        $region32: #{tpu_custom_call.1} parent=23 // pred_fallthru
          _
      $region24: #{tpu_custom_call.1} parent=5 // pred_fallthru
        _
      %p294 = scmp.le.s32.totalorder 1, %s25
      %p295 = scmp.lt.s32.totalorder %s25, 3
      %p296 = pnand %p294, %p295
      %p297 = pneg %p296
      // Predicated region
      $region33: #{tpu_custom_call.1} parent=5 // pred_check
        _
      $region34: #{tpu_custom_call.1} parent=5 // pred_check_branch
        %299 = sbr.rel (%p296) target = $region36
      $region35: #{tpu_custom_call.1} parent=5 // pred_region
        %s300 = ssub.s32 %s25, 1
        %s301 = sand.u32 %s52, 1
        %s302 = scalar_lea.sflag [#allocation3], %s301
        %s303 = sand.u32 %s52, 1
        %s304 = smul.addr %s303, 32
        %s305 = scalar_lea.vmem [#allocation2], %s304
        // Predicated region
        $region37: #{tpu_custom_call.1} parent=35 // pred_check
          %p306 = pneg %p65
        $region38: #{tpu_custom_call.1} parent=35 // pred_check_branch
          %308 = sbr.rel (%p306) target = $region40
        $region39: #{tpu_custom_call.1} parent=35 // pred_region
          %310 = dma.done %s302, 512
        $region40: #{tpu_custom_call.1} parent=35 // pred_fallthru
          _
        %s311 = sand.u32 %s30, 1
        %s312 = scalar_lea.sflag [#allocation6], %s311
        %s313 = sand.u32 %s80, 1
        %s314 = smul.addr %s313, 32
        %s315 = scalar_lea.vmem [#allocation5], %s314
        // Predicated region
        $region41: #{tpu_custom_call.1} parent=35 // pred_check
          %p316 = pneg %p93
        $region42: #{tpu_custom_call.1} parent=35 // pred_check_branch
          %318 = sbr.rel (%p316) target = $region44
        $region43: #{tpu_custom_call.1} parent=35 // pred_region
          %320 = dma.done %s312, 512
        $region44: #{tpu_custom_call.1} parent=35 // pred_fallthru
          _
        // Predicated region
        $region45: #{tpu_custom_call.1} parent=35 // pred_check
          %p321 = pneg %p119
        $region46: #{tpu_custom_call.1} parent=35 // pred_check_branch
          %323 = sbr.rel (%p321) target = $region48
        $region47: #{tpu_custom_call.1} parent=35 // pred_region
          %325 = dma.done [#allocation6], 512
        $region48: #{tpu_custom_call.1} parent=35 // pred_fallthru
          _
        // Predicated region
        $region49: #{tpu_custom_call.1} parent=35 // pred_check
          %p326 = pneg %p145
        $region50: #{tpu_custom_call.1} parent=35 // pred_check_branch
          %328 = sbr.rel (%p326) target = $region52
        $region51: #{tpu_custom_call.1} parent=35 // pred_region
          %330 = dma.done [#allocation9], 512
        $region52: #{tpu_custom_call.1} parent=35 // pred_fallthru
          _
        %s331 = sand.u32 %s52, 1
        %s332 = scalar_lea.sflag [#allocation3], %s331
        %s333 = sand.u32 %s52, 1
        %s334 = smul.addr %s333, 32
        %s335 = scalar_lea.vmem [#allocation2], %s334
        %p336 = pneg %p65
        %p337 = pneg %p62
        %s338 = sand.u32 %s30, 1
        %s339 = scalar_lea.sflag [#allocation6], %s338
        %s340 = sand.u32 %s80, 1
        %s341 = smul.addr %s340, 32
        %s342 = scalar_lea.vmem [#allocation5], %s341
        %p343 = pneg %p93
        %p344 = pneg %p90
        %p345 = pneg %p119
        %p346 = pneg %p116
        %p347 = pneg %p145
        %p348 = pneg %p142
        %p349 = pneg %p173
        %p350 = pneg %p170
        %s351 = sand.u32 %s160, 1
        %s352 = scalar_lea.sflag [#allocation4], %s351
        %s353 = sand.u32 %s160, 1
        %s354 = smul.addr %s353, 32
        %s355 = scalar_lea.vmem [#allocation10], %s354
        %p356 = pneg %p201
        %p357 = pneg %p198
        %s358 = sand.u32 %s188, 1
        %s359 = scalar_lea.sflag [#allocation12], %s358
        %s360 = sand.u32 %s188, 1
        %s361 = smul.addr %s360, 32
        %s362 = scalar_lea.vmem [#allocation11], %s361
        %s363 = smul.u32 4, %s34
        %s364 = smul.u32 4, %s34
        %s365 = smul.u32 4, %s34
        %s366 = smul.u32 4, %s34
        %s367 = smul.u32 4, %s34
        %s368 = smul.u32 4, %s34
        %v369 = vld [vmem:[%s305] sm:$0xff]
        %v370 = vld [vmem:[%s305 + $0x8] sm:$0xff]
        %v371 = vld [vmem:[%s305 + $0x10] sm:$0xff]
        %v372 = vld [vmem:[%s305 + $0x18] sm:$0xff]
        %v373 = vld [vmem:[%s315] sm:$0xff]
        %v374 = vld [vmem:[%s315 + $0x8] sm:$0xff]
        %v375 = vld [vmem:[%s315 + $0x10] sm:$0xff]
        %v376 = vld [vmem:[%s315 + $0x18] sm:$0xff]
        %v377 = vld [vmem:[#allocation7] sm:$0xff]
        %v378 = vld [vmem:[#allocation7 + $0x8] sm:$0xff]
        %v379 = vld [vmem:[#allocation7 + $0x10] sm:$0xff]
        %v380 = vld [vmem:[#allocation7 + $0x18] sm:$0xff]
        %v381 = vld [vmem:[#allocation8] sm:$0xff]
        %v382 = vld [vmem:[#allocation8 + $0x8] sm:$0xff]
        %v383 = vld [vmem:[#allocation8 + $0x10] sm:$0xff]
        %v384 = vld [vmem:[#allocation8 + $0x18] sm:$0xff]
        %v385 = vmul.f32 %v369, %v377
        %v386 = vmul.f32 %v370, %v378
        %v387 = vmul.f32 %v371, %v379
        %v388 = vmul.f32 %v372, %v380
        %v389 = vmul.f32 %v373, %v381
        %v390 = vmul.f32 %v374, %v382
        %v391 = vmul.f32 %v375, %v383
        %v392 = vmul.f32 %v376, %v384
        %v393 = vsub.f32 %v385, %v389
        %v394 = vsub.f32 %v386, %v390
        %v395 = vsub.f32 %v387, %v391
        %v396 = vsub.f32 %v388, %v392
        %397 = vst [vmem:[%s355] sm:$0xff] %v393
        %398 = vst [vmem:[%s355 + $0x8] sm:$0xff] %v394
        %399 = vst [vmem:[%s355 + $0x10] sm:$0xff] %v395
        %400 = vst [vmem:[%s355 + $0x18] sm:$0xff] %v396
        %v401 = vmul.f32 %v369, %v381
        %v402 = vmul.f32 %v370, %v382
        %v403 = vmul.f32 %v371, %v383
        %v404 = vmul.f32 %v372, %v384
        %v405 = vmul.f32 %v373, %v377
        %v406 = vmul.f32 %v374, %v378
        %v407 = vmul.f32 %v375, %v379
        %v408 = vmul.f32 %v376, %v380
        %v409 = vadd.f32 %v401, %v405
        %v410 = vadd.f32 %v402, %v406
        %v411 = vadd.f32 %v403, %v407
        %v412 = vadd.f32 %v404, %v408
        %413 = vst [vmem:[%s362] sm:$0xff] %v409
        %414 = vst [vmem:[%s362 + $0x8] sm:$0xff] %v410
        %415 = vst [vmem:[%s362 + $0x10] sm:$0xff] %v411
        %416 = vst [vmem:[%s362 + $0x18] sm:$0xff] %v412
        %s417 = sand.u32 %s160, 1
        %s418 = scalar_lea.sflag [#allocation4], %s417
        %s419 = sand.u32 %s160, 1
        %s420 = smul.addr %s419, 32
        %s421 = scalar_lea.vmem [#allocation10], %s420
        %s422 = sand.u32 %s188, 1
        %s423 = scalar_lea.sflag [#allocation12], %s422
        %s424 = sand.u32 %s188, 1
        %s425 = smul.addr %s424, 32
        %s426 = scalar_lea.vmem [#allocation11], %s425
        // Predicated region
        $region53: #{tpu_custom_call.1} parent=35 // pred_check
          %p427 = pneg %p170
        $region54: #{tpu_custom_call.1} parent=35 // pred_check_branch
          %429 = sbr.rel (%p427) target = $region56
        $region55: #{tpu_custom_call.1} parent=35 // pred_region
          %s430 = smul.u32 4, %s34
          %432 = vsyncadd %s418, 0
          %s433 = smul.addr %s35, 4
          %s434 = sadd.s32 %s430, %s433
          %s435 = smul.addr %s434, 8
          %s436 = scalar_lea.hbm %s4, %s435
          %s438 = sshll.u32 %s421, 4
          %s439 = int_to_ptr.vmem [resolvable:$true] %s438
          %s440 = sshll.u32 %s436, 4
          %s441 = int_to_ptr.hbm [resolvable:$true] %s440
          %443 = dma.vmem_to_hbm [thread:$0]  %s439, 512, %s441, %s418
        $region56: #{tpu_custom_call.1} parent=35 // pred_fallthru
          _
        // Predicated region
        $region57: #{tpu_custom_call.1} parent=35 // pred_check
          %p444 = pneg %p198
        $region58: #{tpu_custom_call.1} parent=35 // pred_check_branch
          %446 = sbr.rel (%p444) target = $region60
        $region59: #{tpu_custom_call.1} parent=35 // pred_region
          %s447 = smul.u32 4, %s34
          %449 = vsyncadd %s423, 0
          %s450 = smul.addr %s35, 4
          %s451 = sadd.s32 %s447, %s450
          %s452 = smul.addr %s451, 8
          %s453 = scalar_lea.hbm %s5, %s452
          %s455 = sshll.u32 %s426, 4
          %s456 = int_to_ptr.vmem [resolvable:$true] %s455
          %s457 = sshll.u32 %s453, 4
          %s458 = int_to_ptr.hbm [resolvable:$true] %s457
          %460 = dma.vmem_to_hbm [thread:$0]  %s456, 512, %s458, %s423
        $region60: #{tpu_custom_call.1} parent=35 // pred_fallthru
          _
      $region36: #{tpu_custom_call.1} parent=5 // pred_fallthru
        _
      %p461 = scmp.le.s32.totalorder 2, %s25
      // Predicated region
      $region61: #{tpu_custom_call.1} parent=5 // pred_check
        %p462 = pneg %p461
      $region62: #{tpu_custom_call.1} parent=5 // pred_check_branch
        %464 = sbr.rel (%p462) target = $region64
      $region63: #{tpu_custom_call.1} parent=5 // pred_region
        %s465 = ssub.s32 %s25, 2
        // Predicated region
        $region65: #{tpu_custom_call.1} parent=63 // pred_check
          %p466 = pneg %p176
        $region66: #{tpu_custom_call.1} parent=63 // pred_check_branch
          %468 = sbr.rel (%p466) target = $region68
        $region67: #{tpu_custom_call.1} parent=63 // pred_region
          %s469 = sand.u32 %s161, 1
          %s470 = scalar_lea.sflag [#allocation4], %s469
          %s471 = sand.u32 %s161, 1
          %s472 = smul.addr %s471, 32
          %s473 = scalar_lea.vmem [#allocation10], %s472
          %475 = dma.done %s470, 512
        $region68: #{tpu_custom_call.1} parent=63 // pred_fallthru
          _
        // Predicated region
        $region69: #{tpu_custom_call.1} parent=63 // pred_check
          %p476 = pneg %p204
        $region70: #{tpu_custom_call.1} parent=63 // pred_check_branch
          %478 = sbr.rel (%p476) target = $region72
        $region71: #{tpu_custom_call.1} parent=63 // pred_region
          %s479 = sand.u32 %s189, 1
          %s480 = scalar_lea.sflag [#allocation12], %s479
          %s481 = sand.u32 %s189, 1
          %s482 = smul.addr %s481, 32
          %s483 = scalar_lea.vmem [#allocation11], %s482
          %485 = dma.done %s480, 512
        $region72: #{tpu_custom_call.1} parent=63 // pred_fallthru
          _
      $region64: #{tpu_custom_call.1} parent=5 // pred_fallthru
        _
    $region6: #{tpu_custom_call.1} parent=1 // loop_footer
      %s29 = sadd.s32 1, %s25
    $region7: #{tpu_custom_call.1} parent=1 // loop_footer_branch
      %24 = sbr.rel target = $region3
    $region8: #{tpu_custom_call.1} parent=1 // loop_exit
      _
    %486 = vsyncpa [#allocation3], 1
    %s487 = scalar_lea.sflag [#allocation3], 1
    %488 = vsyncpa %s487, 1
    %489 = vsyncpa [#allocation6], 1
    %s490 = scalar_lea.sflag [#allocation6], 1
    %491 = vsyncpa %s490, 1
    %492 = vsyncpa [#allocation9], 1
    %493 = vsyncpa [#allocation4], 1
    %s494 = scalar_lea.sflag [#allocation4], 1
    %495 = vsyncpa %s494, 1
    %496 = vsyncpa [#allocation12], 1
    %s497 = scalar_lea.sflag [#allocation12], 1
    %498 = vsyncpa %s497, 1

</llo_original>
